<compile_context>
chip_gen: v7x
topology: tpu7x:2x2x1
jax: 0.10.0
libtpu: 0.0.40
codegen_flags: <defaults>
</compile_context>

<pallas_src>
import math

import jax
import jax.numpy as jnp
from jax import lax
from jax.experimental import pallas as pl
from jax.experimental.pallas import tpu as pltpu


# ------------------------- fused kernel -------------------------

def _make_fused_attn_kernel(num_heads, head_dim, hidden, compute_dtype):
    H = hidden

    def kernel(x_ref, wqkv_ref, bqkv_ref, mask_ref, o_ref):
        # One batch element per grid step.
        x = x_ref[0].astype(compute_dtype)                      # (S, H)
        w = wqkv_ref[...].astype(compute_dtype)                 # (H, 3H), VMEM-resident
        # Fused Q/K/V projection: single MXU pass, lane-dense 3H output, f32 accumulate.
        qkv = jnp.dot(x, w, preferred_element_type=jnp.float32) + bqkv_ref[...]   # (S, 3H)
        mask = mask_ref[0]                                      # (1, S) additive mask

        ctx_heads = []
        for h in range(num_heads):                              # static unrolled loop
            off = h * head_dim
            qh = qkv[:, off:off + head_dim]                     # (S, d); 1/sqrt(d) already folded in
            kh = qkv[:, H + off:H + off + head_dim]             # (S, d)
            vh = qkv[:, 2 * H + off:2 * H + off + head_dim]     # (S, d)

            # scores = q @ k^T without materializing a transpose (contract last dims).
            s = lax.dot_general(
                qh.astype(compute_dtype), kh.astype(compute_dtype),
                (((1,), (1,)), ((), ())),
                preferred_element_type=jnp.float32)             # (S, S)
            s = s + mask                                        # broadcast over query rows
            s = s - jnp.max(s, axis=-1, keepdims=True)          # stable softmax (f32)
            p = jnp.exp(s)
            denom = jnp.sum(p, axis=-1, keepdims=True)
            p = p * pl.reciprocal(denom, approx=True)           # EUP reciprocal, free slot
            # dropout(p) == p at inference.
            ctx_heads.append(
                jnp.dot(p.astype(compute_dtype), vh.astype(compute_dtype),
                        preferred_element_type=jnp.float32))    # (S, d)

        # Heads concatenated -> lane-dense (S, H) slab; single store. This directly
        # realizes the PyTorch permute(0,2,1,3).view(B,S,H) with no transpose.
        o_ref[0] = jnp.concatenate(ctx_heads, axis=-1).astype(o_ref.dtype)

    return kernel


# ------------------------- wrapper -------------------------

def anti_self_attention(hidden_states, params, attention_mask, num_heads,
                        compute_dtype=jnp.float32):
    """hidden_states: [B, S, H] f32; attention_mask: additive [B, 1, 1, S] f32."""
    B, S, H = hidden_states.shape
    d = H // num_heads
    scale = 1.0 / math.sqrt(d)

    # Fuse the three projections into one (H, 3H) weight; fold the score scale into Wq/bq.
    wqkv = jnp.concatenate(
        [params["wq"] * scale, params["wk"], params["wv"]], axis=1)           # (H, 3H)
    bqkv = jnp.concatenate(
        [params["bq"] * scale, params["bk"], params["bv"]]).reshape(1, 3 * H)  # (1, 3H)

    mask = attention_mask.reshape(B, 1, S).astype(jnp.float32)                # (B, 1, S)

    kernel = _make_fused_attn_kernel(num_heads, d, H, compute_dtype)

    return pl.pallas_call(
        kernel,
        out_shape=jax.ShapeDtypeStruct((B, S, H), hidden_states.dtype),
        grid=(B,),
        in_specs=[
            pl.BlockSpec((1, S, H), lambda b: (b, 0, 0)),        # hidden_states, per batch
            pl.BlockSpec((H, 3 * H), lambda b: (0, 0)),          # fused weights (resident)
            pl.BlockSpec((1, 3 * H), lambda b: (0, 0)),          # fused bias (resident)
            pl.BlockSpec((1, 1, S), lambda b: (b, 0, 0)),        # additive mask, per batch
        ],
        out_specs=pl.BlockSpec((1, S, H), lambda b: (b, 0, 0)),  # lane-dense [B, S, H]
        compiler_params=pltpu.CompilerParams(
            dimension_semantics=("parallel",),                   # megacore-shardable on v7x
            vmem_limit_bytes=32 * 1024 * 1024,                   # explicit budget (fits all gens)
        ),
    )(hidden_states, wqkv, bqkv, mask)


# ------------------------- reference (plain JAX) -------------------------

def ref_anti_self_attention(hidden_states, params, attention_mask, num_heads):
    B, S, H = hidden_states.shape
    d = H // num_heads
    q = hidden_states @ params["wq"] + params["bq"]
    k = hidden_states @ params["wk"] + params["bk"]
    v = hidden_states @ params["wv"] + params["bv"]
    to_heads = lambda t: t.reshape(B, S, num_heads, d).transpose(0, 2, 1, 3)
    Q, K, V = to_heads(q), to_heads(k), to_heads(v)
    scores = jnp.einsum("bhqd,bhkd->bhqk", Q, K) / math.sqrt(d)
    scores = scores + attention_mask                           # (B,1,1,S) broadcast
    probs = jax.nn.softmax(scores, axis=-1)
    ctx = jnp.einsum("bhqk,bhkd->bhqd", probs, V)
    return ctx.transpose(0, 2, 1, 3).reshape(B, S, H)


# ------------------------- main -------------------------

if __name__ == "__main__":
    B, S, H = 2, 8, 32
    NUM_HEADS = 4

    key = jax.random.PRNGKey(0)
    k_x, k_wq, k_wk, k_wv, k_bq, k_bk, k_bv = jax.random.split(key, 7)

    # Deterministic parameter init (nn.Linear(H, H) x3, stored transposed as (in, out)).
    params = {
        "wq": 0.05 * jax.random.normal(k_wq, (H, H), jnp.float32),
        "wk": 0.05 * jax.random.normal(k_wk, (H, H), jnp.float32),
        "wv": 0.05 * jax.random.normal(k_wv, (H, H), jnp.float32),
        "bq": 0.01 * jax.random.normal(k_bq, (H,), jnp.float32),
        "bk": 0.01 * jax.random.normal(k_bk, (H,), jnp.float32),
        "bv": 0.01 * jax.random.normal(k_bv, (H,), jnp.float32),
    }

    hidden_states = jax.random.normal(k_x, (B, S, H), jnp.float32)

    # Additive attention mask [B, 1, 1, S]: mask out the last 2 keys of batch 1.
    keep = jnp.ones((B, S), jnp.float32).at[1, -2:].set(0.0)
    attention_mask = ((1.0 - keep) * -1e9).reshape(B, 1, 1, S)

    # compute_dtype=jnp.bfloat16 is the recommended MXU setting on v6e/v7x; the demo uses
    # f32 so the result matches the f32 reference to tight tolerance.
    out = anti_self_attention(hidden_states, params, attention_mask, NUM_HEADS,
                              compute_dtype=jnp.float32)
    out = jax.block_until_ready(out)

    ref = ref_anti_self_attention(hidden_states, params, attention_mask, NUM_HEADS)
    assert out.shape == (B, S, H)
    # Slightly relaxed tolerance for the approximate EUP reciprocal in the softmax.
    assert jnp.allclose(out, ref, atol=3e-3, rtol=3e-3), "mismatch vs reference"

    print("KERNEL_OK")
</pallas_src>

<mosaic_0001>
module attributes {stable_mosaic.version = 11 : i64} {
  func.func @kernel(%arg0: i32, %arg1: memref<1x8x32xf32, #tpu.memory_space<vmem>>, %arg2: memref<32x96xf32, #tpu.memory_space<vmem>>, %arg3: memref<1x96xf32, #tpu.memory_space<vmem>>, %arg4: memref<1x1x8xf32, #tpu.memory_space<vmem>>, %arg5: memref<1x8x32xf32, #tpu.memory_space<vmem>>) attributes {dimension_semantics = [#tpu.dimension_semantics<parallel>], iteration_bounds = array<i64: 2>, scalar_prefetch = 0 : i64, scratch_operands = 0 : i64, tpu.core_type = #tpu.core_type<tc>, window_params = [{transform_indices = @transform_0, window_bounds = array<i64: 1, 8, 32>}, {pipeline_mode = #tpu.pipeline_mode<synchronous>, transform_indices = @transform_1, window_bounds = array<i64: 32, 96>}, {pipeline_mode = #tpu.pipeline_mode<synchronous>, transform_indices = @transform_2, window_bounds = array<i64: 1, 96>}, {transform_indices = @transform_3, window_bounds = array<i64: 1, 1, 8>}, {transform_indices = @transform_4, window_bounds = array<i64: 1, 8, 32>}]} {
    %c0 = arith.constant 0 : index
    %c0_0 = arith.constant 0 : index
    %c0_1 = arith.constant 0 : index
    %0 = vector.load %arg1[%c0, %c0_0, %c0_1] : memref<1x8x32xf32, #tpu.memory_space<vmem>>, vector<1x8x32xf32>
    %1 = vector.shape_cast %0 : vector<1x8x32xf32> to vector<8x32xf32>
    %c0_2 = arith.constant 0 : index
    %c0_3 = arith.constant 0 : index
    %2 = vector.load %arg2[%c0_2, %c0_3] : memref<32x96xf32, #tpu.memory_space<vmem>>, vector<32x96xf32>
    %cst = arith.constant dense<0.000000e+00> : vector<8x96xf32>
    %3 = tpu.matmul %1, %2, %cst {dimension_numbers = #tpu.dot_dimension_numbers<[1], [0], [0], [1], [0, 0, 1, 1], [], []>} : vector<8x32xf32>, vector<32x96xf32>, vector<8x96xf32> -> vector<8x96xf32>
    %c0_4 = arith.constant 0 : index
    %c0_5 = arith.constant 0 : index
    %4 = vector.load %arg3[%c0_4, %c0_5] : memref<1x96xf32, #tpu.memory_space<vmem>>, vector<1x96xf32>
    %5 = vector.broadcast %4 : vector<1x96xf32> to vector<8x96xf32>
    %6 = arith.addf %3, %5 : vector<8x96xf32>
    %c0_6 = arith.constant 0 : index
    %c0_7 = arith.constant 0 : index
    %c0_8 = arith.constant 0 : index
    %7 = vector.load %arg4[%c0_6, %c0_7, %c0_8] : memref<1x1x8xf32, #tpu.memory_space<vmem>>, vector<1x1x8xf32>
    %8 = vector.shape_cast %7 : vector<1x1x8xf32> to vector<1x8xf32>
    %9 = vector.extract_strided_slice %6 {offsets = [0, 0], sizes = [8, 8], strides = [1, 1]} : vector<8x96xf32> to vector<8x8xf32>
    %10 = vector.extract_strided_slice %6 {offsets = [0, 32], sizes = [8, 8], strides = [1, 1]} : vector<8x96xf32> to vector<8x8xf32>
    %11 = vector.extract_strided_slice %6 {offsets = [0, 64], sizes = [8, 8], strides = [1, 1]} : vector<8x96xf32> to vector<8x8xf32>
    %cst_9 = arith.constant dense<0.000000e+00> : vector<8x8xf32>
    %12 = tpu.matmul %9, %10, %cst_9 {dimension_numbers = #tpu.dot_dimension_numbers<[1], [1], [0], [0], [0, 0, 1, 0], [], []>} : vector<8x8xf32>, vector<8x8xf32>, vector<8x8xf32> -> vector<8x8xf32>
    %13 = vector.broadcast %8 : vector<1x8xf32> to vector<8x8xf32>
    %14 = arith.addf %12, %13 : vector<8x8xf32>
    %cst_10 = arith.constant dense<0xFF800000> : vector<8xf32>
    %15 = vector.multi_reduction <maximumf>, %14, %cst_10 [1] : vector<8x8xf32> to vector<8xf32>
    %16 = vector.shape_cast %15 : vector<8xf32> to vector<8x1xf32>
    %17 = vector.broadcast %16 : vector<8x1xf32> to vector<8x8xf32>
    %18 = arith.subf %14, %17 : vector<8x8xf32>
    %19 = math.exp %18 : vector<8x8xf32>
    %cst_11 = arith.constant dense<0.000000e+00> : vector<8xf32>
    %20 = vector.multi_reduction <add>, %19, %cst_11 [1] : vector<8x8xf32> to vector<8xf32>
    %21 = vector.shape_cast %20 : vector<8xf32> to vector<8x1xf32>
    %22 = tpu.reciprocal %21 {approx = true} : vector<8x1xf32> -> vector<8x1xf32>
    %23 = vector.broadcast %22 : vector<8x1xf32> to vector<8x8xf32>
    %24 = arith.mulf %19, %23 : vector<8x8xf32>
    %cst_12 = arith.constant dense<0.000000e+00> : vector<8x8xf32>
    %25 = tpu.matmul %24, %11, %cst_12 {dimension_numbers = #tpu.dot_dimension_numbers<[1], [0], [0], [1], [0, 0, 1, 1], [], []>} : vector<8x8xf32>, vector<8x8xf32>, vector<8x8xf32> -> vector<8x8xf32>
    %26 = vector.extract_strided_slice %6 {offsets = [0, 8], sizes = [8, 8], strides = [1, 1]} : vector<8x96xf32> to vector<8x8xf32>
    %27 = vector.extract_strided_slice %6 {offsets = [0, 40], sizes = [8, 8], strides = [1, 1]} : vector<8x96xf32> to vector<8x8xf32>
    %28 = vector.extract_strided_slice %6 {offsets = [0, 72], sizes = [8, 8], strides = [1, 1]} : vector<8x96xf32> to vector<8x8xf32>
    %cst_13 = arith.constant dense<0.000000e+00> : vector<8x8xf32>
    %29 = tpu.matmul %26, %27, %cst_13 {dimension_numbers = #tpu.dot_dimension_numbers<[1], [1], [0], [0], [0, 0, 1, 0], [], []>} : vector<8x8xf32>, vector<8x8xf32>, vector<8x8xf32> -> vector<8x8xf32>
    %30 = vector.broadcast %8 : vector<1x8xf32> to vector<8x8xf32>
    %31 = arith.addf %29, %30 : vector<8x8xf32>
    %cst_14 = arith.constant dense<0xFF800000> : vector<8xf32>
    %32 = vector.multi_reduction <maximumf>, %31, %cst_14 [1] : vector<8x8xf32> to vector<8xf32>
    %33 = vector.shape_cast %32 : vector<8xf32> to vector<8x1xf32>
    %34 = vector.broadcast %33 : vector<8x1xf32> to vector<8x8xf32>
    %35 = arith.subf %31, %34 : vector<8x8xf32>
    %36 = math.exp %35 : vector<8x8xf32>
    %cst_15 = arith.constant dense<0.000000e+00> : vector<8xf32>
    %37 = vector.multi_reduction <add>, %36, %cst_15 [1] : vector<8x8xf32> to vector<8xf32>
    %38 = vector.shape_cast %37 : vector<8xf32> to vector<8x1xf32>
    %39 = tpu.reciprocal %38 {approx = true} : vector<8x1xf32> -> vector<8x1xf32>
    %40 = vector.broadcast %39 : vector<8x1xf32> to vector<8x8xf32>
    %41 = arith.mulf %36, %40 : vector<8x8xf32>
    %cst_16 = arith.constant dense<0.000000e+00> : vector<8x8xf32>
    %42 = tpu.matmul %41, %28, %cst_16 {dimension_numbers = #tpu.dot_dimension_numbers<[1], [0], [0], [1], [0, 0, 1, 1], [], []>} : vector<8x8xf32>, vector<8x8xf32>, vector<8x8xf32> -> vector<8x8xf32>
    %43 = vector.extract_strided_slice %6 {offsets = [0, 16], sizes = [8, 8], strides = [1, 1]} : vector<8x96xf32> to vector<8x8xf32>
    %44 = vector.extract_strided_slice %6 {offsets = [0, 48], sizes = [8, 8], strides = [1, 1]} : vector<8x96xf32> to vector<8x8xf32>
    %45 = vector.extract_strided_slice %6 {offsets = [0, 80], sizes = [8, 8], strides = [1, 1]} : vector<8x96xf32> to vector<8x8xf32>
    %cst_17 = arith.constant dense<0.000000e+00> : vector<8x8xf32>
    %46 = tpu.matmul %43, %44, %cst_17 {dimension_numbers = #tpu.dot_dimension_numbers<[1], [1], [0], [0], [0, 0, 1, 0], [], []>} : vector<8x8xf32>, vector<8x8xf32>, vector<8x8xf32> -> vector<8x8xf32>
    %47 = vector.broadcast %8 : vector<1x8xf32> to vector<8x8xf32>
    %48 = arith.addf %46, %47 : vector<8x8xf32>
    %cst_18 = arith.constant dense<0xFF800000> : vector<8xf32>
    %49 = vector.multi_reduction <maximumf>, %48, %cst_18 [1] : vector<8x8xf32> to vector<8xf32>
    %50 = vector.shape_cast %49 : vector<8xf32> to vector<8x1xf32>
    %51 = vector.broadcast %50 : vector<8x1xf32> to vector<8x8xf32>
    %52 = arith.subf %48, %51 : vector<8x8xf32>
    %53 = math.exp %52 : vector<8x8xf32>
    %cst_19 = arith.constant dense<0.000000e+00> : vector<8xf32>
    %54 = vector.multi_reduction <add>, %53, %cst_19 [1] : vector<8x8xf32> to vector<8xf32>
    %55 = vector.shape_cast %54 : vector<8xf32> to vector<8x1xf32>
    %56 = tpu.reciprocal %55 {approx = true} : vector<8x1xf32> -> vector<8x1xf32>
    %57 = vector.broadcast %56 : vector<8x1xf32> to vector<8x8xf32>
    %58 = arith.mulf %53, %57 : vector<8x8xf32>
    %cst_20 = arith.constant dense<0.000000e+00> : vector<8x8xf32>
    %59 = tpu.matmul %58, %45, %cst_20 {dimension_numbers = #tpu.dot_dimension_numbers<[1], [0], [0], [1], [0, 0, 1, 1], [], []>} : vector<8x8xf32>, vector<8x8xf32>, vector<8x8xf32> -> vector<8x8xf32>
    %60 = vector.extract_strided_slice %6 {offsets = [0, 24], sizes = [8, 8], strides = [1, 1]} : vector<8x96xf32> to vector<8x8xf32>
    %61 = vector.extract_strided_slice %6 {offsets = [0, 56], sizes = [8, 8], strides = [1, 1]} : vector<8x96xf32> to vector<8x8xf32>
    %62 = vector.extract_strided_slice %6 {offsets = [0, 88], sizes = [8, 8], strides = [1, 1]} : vector<8x96xf32> to vector<8x8xf32>
    %cst_21 = arith.constant dense<0.000000e+00> : vector<8x8xf32>
    %63 = tpu.matmul %60, %61, %cst_21 {dimension_numbers = #tpu.dot_dimension_numbers<[1], [1], [0], [0], [0, 0, 1, 0], [], []>} : vector<8x8xf32>, vector<8x8xf32>, vector<8x8xf32> -> vector<8x8xf32>
    %64 = vector.broadcast %8 : vector<1x8xf32> to vector<8x8xf32>
    %65 = arith.addf %63, %64 : vector<8x8xf32>
    %cst_22 = arith.constant dense<0xFF800000> : vector<8xf32>
    %66 = vector.multi_reduction <maximumf>, %65, %cst_22 [1] : vector<8x8xf32> to vector<8xf32>
    %67 = vector.shape_cast %66 : vector<8xf32> to vector<8x1xf32>
    %68 = vector.broadcast %67 : vector<8x1xf32> to vector<8x8xf32>
    %69 = arith.subf %65, %68 : vector<8x8xf32>
    %70 = math.exp %69 : vector<8x8xf32>
    %cst_23 = arith.constant dense<0.000000e+00> : vector<8xf32>
    %71 = vector.multi_reduction <add>, %70, %cst_23 [1] : vector<8x8xf32> to vector<8xf32>
    %72 = vector.shape_cast %71 : vector<8xf32> to vector<8x1xf32>
    %73 = tpu.reciprocal %72 {approx = true} : vector<8x1xf32> -> vector<8x1xf32>
    %74 = vector.broadcast %73 : vector<8x1xf32> to vector<8x8xf32>
    %75 = arith.mulf %70, %74 : vector<8x8xf32>
    %cst_24 = arith.constant dense<0.000000e+00> : vector<8x8xf32>
    %76 = tpu.matmul %75, %62, %cst_24 {dimension_numbers = #tpu.dot_dimension_numbers<[1], [0], [0], [1], [0, 0, 1, 1], [], []>} : vector<8x8xf32>, vector<8x8xf32>, vector<8x8xf32> -> vector<8x8xf32>
    %77 = tpu.concatenate %25, %42, %59, %76 in 1 : vector<8x8xf32>, vector<8x8xf32>, vector<8x8xf32>, vector<8x8xf32> -> vector<8x32xf32>
    %c0_25 = arith.constant 0 : index
    %c0_26 = arith.constant 0 : index
    %c0_27 = arith.constant 0 : index
    %78 = vector.load %arg5[%c0_25, %c0_26, %c0_27] : memref<1x8x32xf32, #tpu.memory_space<vmem>>, vector<1x8x32xf32>
    %79 = vector.shape_cast %78 : vector<1x8x32xf32> to vector<8x32xf32>
    %80 = vector.shape_cast %77 : vector<8x32xf32> to vector<1x8x32xf32>
    tpu.vector_store %arg5[%c0_25, %c0_26, %c0_27], %80 {strides = array<i32>} : memref<1x8x32xf32, #tpu.memory_space<vmem>>, vector<1x8x32xf32>,
    return
  }
  func.func @transform_0(%arg0: i32) -> (i32, i32, i32) {
    %c0_i32 = arith.constant 0 : i32
    %c0_i32_0 = arith.constant 0 : i32
    %c0_i32_1 = arith.constant 0 : i32
    return %arg0, %c0_i32, %c0_i32_0 : i32, i32, i32
  }
  func.func @transform_1(%arg0: i32) -> (i32, i32) {
    %c0_i32 = arith.constant 0 : i32
    %c0_i32_0 = arith.constant 0 : i32
    %c0_i32_1 = arith.constant 0 : i32
    return %c0_i32, %c0_i32_0 : i32, i32
  }
  func.func @transform_2(%arg0: i32) -> (i32, i32) {
    %c0_i32 = arith.constant 0 : i32
    %c0_i32_0 = arith.constant 0 : i32
    %c0_i32_1 = arith.constant 0 : i32
    return %c0_i32, %c0_i32_0 : i32, i32
  }
  func.func @transform_3(%arg0: i32) -> (i32, i32, i32) {
    %c0_i32 = arith.constant 0 : i32
    %c0_i32_0 = arith.constant 0 : i32
    %c0_i32_1 = arith.constant 0 : i32
    return %arg0, %c0_i32, %c0_i32_0 : i32, i32, i32
  }
  func.func @transform_4(%arg0: i32) -> (i32, i32, i32) {
    %c0_i32 = arith.constant 0 : i32
    %c0_i32_0 = arith.constant 0 : i32
    %c0_i32_1 = arith.constant 0 : i32
    return %arg0, %c0_i32, %c0_i32_0 : i32, i32, i32
  }
}

</mosaic_0001>

<llo_original>
// kernel: tpu_custom_call.1
$region0: #{tpu_custom_call.1}
  #allocation0 [shape = 'u32[]', space=smem, size = 0x4, offset = 0x4, fixed_abs, tag = 'smem constant byte address 0x4 - core index']
  #allocation1 [shape = 'u32[144,128]{1,0:T(1,128)}', space=vmem, size = 0x12000, scoped, tag = 'internal scratch']
  %s0 = inlined_call_operand.hbm [shape: f32[2,8,32], index: 0, kind: input, shape index: {}]
  %s1 = inlined_call_operand.hbm [shape: f32[32,96], index: 1, kind: input, shape index: {}]
  %s2 = inlined_call_operand.vmem [shape: f32[1,96], index: 2, kind: input, shape index: {}]
  %s3 = inlined_call_operand.vmem [shape: f32[2,1,8], index: 3, kind: input, shape index: {}]
  %s4 = inlined_call_operand.hbm [shape: f32[2,8,32], index: 4, kind: output, shape index: {}]
  %s5 = sld [smem:[#allocation0]]
  $region57: #{tpu_custom_call.1} parent=0
    _
  %s7 = ssub.s32 1, %s5
  %s8 = scalar_select 0, %s7, %s5
  $region1: #{tpu_custom_call.1} parent=0
    #allocation2 [shape = 'u8[8192]{0}', space=vmem, size = 0x2000, scoped, tag = 'input window, operand 0']
    #allocation3 [shape = 's32[2]{0}', space=sflag, size = 0x8, scoped, tag = 'scoped memory for tpu_custom_call.1']
    #allocation4 [shape = 's32[2]{0}', space=sflag, size = 0x8, scoped, tag = 'scoped memory for tpu_custom_call.1']
    #allocation5 [shape = 'u8[16384]{0}', space=vmem, size = 0x4000, scoped, tag = 'input window, operand 1, single buffered']
    #allocation6 [shape = 's32[1]{0}', space=sflag, size = 0x4, scoped, tag = 'scoped memory for tpu_custom_call.1']
    #allocation7 [shape = 'u8[8192]{0}', space=vmem, size = 0x2000, scoped, tag = 'output window, operand 0']
    %9 = vsyncpa [#allocation3], 0
    %s10 = scalar_lea.sflag [#allocation3], 1
    %11 = vsyncpa %s10, 0
    %12 = vsyncpa [#allocation6], 0
    %13 = vsyncpa [#allocation4], 0
    %s14 = scalar_lea.sflag [#allocation4], 1
    %15 = vsyncpa %s14, 0
    loop: start=0, step=1, limit=4
    $region2: #{tpu_custom_call.1} parent=1 // loop_pre_header
      _
    $region3: #{tpu_custom_call.1} parent=1 // loop_header
      %s17 = sphi 0, %s21
      %p18 = scmp.ge.s32.totalorder %s17, 4
      %s27 = sphi 0, %s29
      %s30 = sphi 0, %s27
      %s31 = sphi 0, %s30
      %s47 = sphi 0, %s31
      %s51 = sphi 0, %s51
      %s53 = sphi 0, %s51
      %s54 = sphi 0, %s53
      %s68 = sphi 0, %s54
      %s72 = sphi 0, %s72
      %s74 = sphi 0, %s72
      %s75 = sphi 0, %s74
      %s89 = sphi 0, %s75
      %s95 = sphi 0, %s97
      %s98 = sphi 0, %s95
      %s99 = sphi 0, %s98
      %s115 = sphi 0, %s99
      %s121 = sphi 0, %s123
      %s124 = sphi 0, %s121
      %s125 = sphi 0, %s124
      %s141 = sphi 0, %s125
    $region4: #{tpu_custom_call.1} parent=1 // loop_header_branch
      %20 = sbr.rel (%p18) target = $region8
    $region5: #{tpu_custom_call.1} parent=1 // loop_body
      %s22 = ssub.s32 %s17, 1
      %s23 = ssub.s32 %s17, 2
      %s24 = sadd.s32 %s17, 1
      %s25 = ssub.s32 %s17, %s24
      %p26 = scmp.eq.s32.totalorder %s25, 0
      %s28 = sadd.s32 %s27, 1
      %s29 = scalar_select %p26, %s27, %s28
      %p32 = pneg %p26
      %p33 = scmp.eq.s32.totalorder %s17, 1
      %p34 = por %p32, %p33
      %p35 = scmp.ne.s32.totalorder %s27, %s30
      %p36 = scmp.eq.s32.totalorder %s17, 0
      %p37 = por %p35, %p36
      %p38 = scmp.ne.s32.totalorder %s27, %s30
      %p39 = scmp.eq.s32.totalorder %s22, 1
      %p40 = por %p38, %p39
      %p41 = scmp.ne.s32.totalorder %s30, %s31
      %p42 = scmp.eq.s32.totalorder %s22, 0
      %p43 = por %p41, %p42
      %p44 = scmp.ne.s32.totalorder %s30, %s31
      %p45 = scmp.eq.s32.totalorder %s23, 1
      %p46 = por %p44, %p45
      %p48 = scmp.ne.s32.totalorder %s31, %s47
      %p49 = scmp.eq.s32.totalorder %s23, 0
      %p50 = por %p48, %p49
      %s52 = sadd.s32 %s51, 1
      %p55 = scmp.eq.s32.totalorder %s17, 1
      %p56 = scmp.ne.s32.totalorder %s51, %s53
      %p57 = scmp.eq.s32.totalorder %s17, 0
      %p58 = por %p56, %p57
      %p59 = scmp.ne.s32.totalorder %s51, %s53
      %p60 = scmp.eq.s32.totalorder %s22, 1
      %p61 = por %p59, %p60
      %p62 = scmp.ne.s32.totalorder %s53, %s54
      %p63 = scmp.eq.s32.totalorder %s22, 0
      %p64 = por %p62, %p63
      %p65 = scmp.ne.s32.totalorder %s53, %s54
      %p66 = scmp.eq.s32.totalorder %s23, 1
      %p67 = por %p65, %p66
      %p69 = scmp.ne.s32.totalorder %s54, %s68
      %p70 = scmp.eq.s32.totalorder %s23, 0
      %p71 = por %p69, %p70
      %s73 = sadd.s32 %s72, 1
      %p76 = scmp.eq.s32.totalorder %s17, 1
      %p77 = scmp.ne.s32.totalorder %s72, %s74
      %p78 = scmp.eq.s32.totalorder %s17, 0
      %p79 = por %p77, %p78
      %p80 = scmp.ne.s32.totalorder %s72, %s74
      %p81 = scmp.eq.s32.totalorder %s22, 1
      %p82 = por %p80, %p81
      %p83 = scmp.ne.s32.totalorder %s74, %s75
      %p84 = scmp.eq.s32.totalorder %s22, 0
      %p85 = por %p83, %p84
      %p86 = scmp.ne.s32.totalorder %s74, %s75
      %p87 = scmp.eq.s32.totalorder %s23, 1
      %p88 = por %p86, %p87
      %p90 = scmp.ne.s32.totalorder %s75, %s89
      %p91 = scmp.eq.s32.totalorder %s23, 0
      %p92 = por %p90, %p91
      %s93 = ssub.s32 %s17, %s24
      %p94 = scmp.eq.s32.totalorder %s93, 0
      %s96 = sadd.s32 %s95, 1
      %s97 = scalar_select %p94, %s95, %s96
      %p100 = pneg %p94
      %p101 = scmp.eq.s32.totalorder %s17, 1
      %p102 = por %p100, %p101
      %p103 = scmp.ne.s32.totalorder %s95, %s98
      %p104 = scmp.eq.s32.totalorder %s17, 0
      %p105 = por %p103, %p104
      %p106 = scmp.ne.s32.totalorder %s95, %s98
      %p107 = scmp.eq.s32.totalorder %s22, 1
      %p108 = por %p106, %p107
      %p109 = scmp.ne.s32.totalorder %s98, %s99
      %p110 = scmp.eq.s32.totalorder %s22, 0
      %p111 = por %p109, %p110
      %p112 = scmp.ne.s32.totalorder %s98, %s99
      %p113 = scmp.eq.s32.totalorder %s23, 1
      %p114 = por %p112, %p113
      %p116 = scmp.ne.s32.totalorder %s99, %s115
      %p117 = scmp.eq.s32.totalorder %s23, 0
      %p118 = por %p116, %p117
      %s119 = ssub.s32 %s17, %s24
      %p120 = scmp.eq.s32.totalorder %s119, 0
      %s122 = sadd.s32 %s121, 1
      %s123 = scalar_select %p120, %s121, %s122
      %p126 = pneg %p120
      %p127 = scmp.eq.s32.totalorder %s17, 1
      %p128 = por %p126, %p127
      %p129 = scmp.ne.s32.totalorder %s121, %s124
      %p130 = scmp.eq.s32.totalorder %s17, 0
      %p131 = por %p129, %p130
      %p132 = scmp.ne.s32.totalorder %s121, %s124
      %p133 = scmp.eq.s32.totalorder %s22, 1
      %p134 = por %p132, %p133
      %p135 = scmp.ne.s32.totalorder %s124, %s125
      %p136 = scmp.eq.s32.totalorder %s22, 0
      %p137 = por %p135, %p136
      %p138 = scmp.ne.s32.totalorder %s124, %s125
      %p139 = scmp.eq.s32.totalorder %s23, 1
      %p140 = por %p138, %p139
      %p142 = scmp.ne.s32.totalorder %s125, %s141
      %p143 = scmp.eq.s32.totalorder %s23, 0
      %p144 = por %p142, %p143
      %p145 = scmp.le.s32.totalorder 1, %s17
      %p146 = scmp.lt.s32.totalorder %s17, 3
      %p147 = pnand %p145, %p146
      %p148 = pneg %p147
      // Predicated region
      $region9: #{tpu_custom_call.1} parent=5 // pred_check
        _
      $region10: #{tpu_custom_call.1} parent=5 // pred_check_branch
        %150 = sbr.rel (%p147) target = $region12
      $region11: #{tpu_custom_call.1} parent=5 // pred_region
        %s151 = ssub.s32 %s17, 1
        // Predicated region
        $region13: #{tpu_custom_call.1} parent=11 // pred_check
          %p152 = pneg %p64
        $region14: #{tpu_custom_call.1} parent=11 // pred_check_branch
          %154 = sbr.rel (%p152) target = $region16
        $region15: #{tpu_custom_call.1} parent=11 // pred_region
          %s156 = ssub.s32 512, 512
          %157 = vsyncadd [#allocation6], %s156
          %s158 = sshll.u32 [#allocation5], 4
          %s159 = int_to_ptr.vmem [resolvable:$true] %s158
          %164 = dma.hbm_to_vmem [thread:$0]  %s1, 512, %s159, [#allocation6], 128, 128, 8
        $region16: #{tpu_custom_call.1} parent=11 // pred_fallthru
          _
        // Predicated region
        $region17: #{tpu_custom_call.1} parent=11 // pred_check
          %p165 = pneg %p85
        $region18: #{tpu_custom_call.1} parent=11 // pred_check_branch
          %167 = sbr.rel (%p165) target = $region20
        $region19: #{tpu_custom_call.1} parent=11 // pred_region
          _
        $region20: #{tpu_custom_call.1} parent=11 // pred_fallthru
          _
      $region12: #{tpu_custom_call.1} parent=5 // pred_fallthru
        _
      %p168 = scmp.lt.s32.totalorder %s17, 2
      // Predicated region
      $region21: #{tpu_custom_call.1} parent=5 // pred_check
        %p169 = pneg %p168
      $region22: #{tpu_custom_call.1} parent=5 // pred_check_branch
        %171 = sbr.rel (%p169) target = $region24
      $region23: #{tpu_custom_call.1} parent=5 // pred_region
        // Predicated region
        $region25: #{tpu_custom_call.1} parent=23 // pred_check
          %p172 = pneg %p37
        $region26: #{tpu_custom_call.1} parent=23 // pred_check_branch
          %174 = sbr.rel (%p172) target = $region28
        $region27: #{tpu_custom_call.1} parent=23 // pred_region
          %s175 = sand.u32 %s27, 1
          %s176 = scalar_lea.sflag [#allocation3], %s175
          %s177 = sand.u32 %s27, 1
          %s178 = smul.addr %s177, 8
          %s179 = scalar_lea.vmem [#allocation2], %s178
          %s181 = ssub.s32 128, 128
          %182 = vsyncadd %s176, %s181
          %s183 = smul.addr %s17, 128
          %s184 = scalar_lea.hbm %s0, %s183
          %s186 = sshll.u32 %s179, 4
          %s187 = int_to_ptr.vmem [resolvable:$true] %s186
          %189 = dma.hbm_to_vmem [thread:$0]  %s184, 128, %s187, %s176
        $region28: #{tpu_custom_call.1} parent=23 // pred_fallthru
          _
        // Predicated region
        $region29: #{tpu_custom_call.1} parent=23 // pred_check
          %p190 = pneg %p105
        $region30: #{tpu_custom_call.1} parent=23 // pred_check_branch
          %192 = sbr.rel (%p190) target = $region32
        $region31: #{tpu_custom_call.1} parent=23 // pred_region
          %p193 = scmp.lt.s32.totalorder %s17, 1
          %s194 = scalar_select %p193, %s17, 1
          %s195 = scalar_lea.vmem %s3, %s194
        $region32: #{tpu_custom_call.1} parent=23 // pred_fallthru
          _
      $region24: #{tpu_custom_call.1} parent=5 // pred_fallthru
        _
      %p196 = scmp.le.s32.totalorder 1, %s17
      %p197 = scmp.lt.s32.totalorder %s17, 3
      %p198 = pnand %p196, %p197
      %p199 = pneg %p198
      // Predicated region
      $region33: #{tpu_custom_call.1} parent=5 // pred_check
        _
      $region34: #{tpu_custom_call.1} parent=5 // pred_check_branch
        %201 = sbr.rel (%p198) target = $region36
      $region35: #{tpu_custom_call.1} parent=5 // pred_region
        %s202 = ssub.s32 %s17, 1
        %s203 = sand.u32 %s30, 1
        %s204 = scalar_lea.sflag [#allocation3], %s203
        %s205 = sand.u32 %s30, 1
        %s206 = smul.addr %s205, 8
        %s207 = scalar_lea.vmem [#allocation2], %s206
        // Predicated region
        $region37: #{tpu_custom_call.1} parent=35 // pred_check
          %p208 = pneg %p43
        $region38: #{tpu_custom_call.1} parent=35 // pred_check_branch
          %210 = sbr.rel (%p208) target = $region40
        $region39: #{tpu_custom_call.1} parent=35 // pred_region
          %211 = dma.done %s204, 128
        $region40: #{tpu_custom_call.1} parent=35 // pred_fallthru
          _
        // Predicated region
        $region41: #{tpu_custom_call.1} parent=35 // pred_check
          %p212 = pneg %p64
        $region42: #{tpu_custom_call.1} parent=35 // pred_check_branch
          %214 = sbr.rel (%p212) target = $region44
        $region43: #{tpu_custom_call.1} parent=35 // pred_region
          %215 = dma.done [#allocation6], 512
        $region44: #{tpu_custom_call.1} parent=35 // pred_fallthru
          _
        %s216 = sand.u32 %s30, 1
        %s217 = scalar_lea.sflag [#allocation3], %s216
        %s218 = sand.u32 %s30, 1
        %s219 = smul.addr %s218, 8
        %s220 = scalar_lea.vmem [#allocation2], %s219
        %p221 = pneg %p43
        %p222 = pneg %p40
        %p223 = pneg %p64
        %p224 = pneg %p61
        %p225 = pneg %p85
        %p226 = pneg %p82
        %p227 = scmp.lt.s32.totalorder %s22, 1
        %s228 = scalar_select %p227, %s22, 1
        %s229 = scalar_lea.vmem %s3, %s228
        %p230 = pneg %p111
        %p231 = pneg %p108
        %p232 = pneg %p137
        %p233 = pneg %p134
        %s234 = sand.u32 %s124, 1
        %s235 = scalar_lea.sflag [#allocation4], %s234
        %s236 = sand.u32 %s124, 1
        %s237 = smul.addr %s236, 8
        %s238 = scalar_lea.vmem [#allocation7], %s237
        %p239 = scmp.lt.s32.totalorder %s22, 1
        %s240 = scalar_select %p239, %s22, 1
        %s241 = scalar_lea.vmem %s3, %s240
        %v242 = vld [vmem:[%s207] sm:$0xff]
        %v243 = vld [vmem:[#allocation5] sm:$0xff]
        %v244 = vld [vmem:[#allocation5 + $0x8] sm:$0xff]
        %v245 = vld [vmem:[#allocation5 + $0x10] sm:$0xff]
        %v246 = vld [vmem:[#allocation5 + $0x18] sm:$0xff]
        %v247 = vld [vmem:[%s2] sm:$0x1]
        %v249 = vlaneseq
        %v250 = vshrl.u32 %v249, 7
        %v251 = vsub.s32 0, %v250
        %v252 = vrot.slane %v247, %v251
        %vm254 = vcmask 261120
        %v256 = vsel %vm254, %v242, 0
        %258 = vmatprep.subr.mxu0 0.0
        %259 = vmatpush1.msra.mxu0 %v243
        %260 = vmatprep.subr.mxu0 0.0
        %261 = vmatpush1.msra.mxu0 %v244
        %262 = vmatprep.subr.mxu0 0.0
        %263 = vmatpush1.msra.mxu0 %v245
        %264 = vmatprep.subr.mxu0 0.0
        %265 = vmatpush1.msra.mxu0 %v246
        %266 = vmatprep.subr.mxu0 0.0
        %267 = vmatpush1.msra.mxu0 0.0
        %268 = vmatprep.subr.mxu0 0.0
        %269 = vmatpush1.msra.mxu0 0.0
        %270 = vmatprep.subr.mxu0 0.0
        %271 = vmatpush1.msra.mxu0 0.0
        %272 = vmatprep.subr.mxu0 0.0
        %273 = vmatpush1.msra.mxu0 0.0
        %274 = vmatprep.subr.mxu0 0.0
        %275 = vmatpush1.msra.mxu0 0.0
        %276 = vmatprep.subr.mxu0 0.0
        %277 = vmatpush1.msra.mxu0 0.0
        %278 = vmatprep.subr.mxu0 0.0
        %279 = vmatpush1.msra.mxu0 0.0
        %280 = vmatprep.subr.mxu0 0.0
        %281 = vmatpush1.msra.mxu0 0.0
        %282 = vmatprep.subr.mxu0 0.0
        %283 = vmatpush1.msra.mxu0 0.0
        %284 = vmatprep.subr.mxu0 0.0
        %285 = vmatpush1.msra.mxu0 0.0
        %286 = vmatprep.subr.mxu0 0.0
        %287 = vmatpush1.msra.mxu0 0.0
        %288 = vmatprep.subr.mxu0 0.0
        %289 = vmatpush1.msra.mxu0 0.0
        %290 = vmatprep.subr.mxu0 0.0
        %291 = vmatpush1.msra.mxu0 0.0
        %292 = vmatprep.subr.mxu0 0.0
        %293 = vmatpush1.msra.mxu0 0.0
        %294 = vmatprep.subr.mxu0 0.0
        %295 = vmatpush1.msra.mxu0 0.0
        %296 = vmatprep.subr.mxu0 0.0
        %297 = vmatpush1.msra.mxu0 0.0
        %298 = vmatprep.subr.mxu0 0.0
        %299 = vmatpush1.msra.mxu0 0.0
        %300 = vmatprep.subr.mxu0 0.0
        %301 = vmatpush1.msra.mxu0 0.0
        %302 = vmatprep.subr.mxu0 0.0
        %303 = vmatpush1.msra.mxu0 0.0
        %304 = vmatprep.subr.mxu0 0.0
        %305 = vmatpush1.msra.mxu0 0.0
        %306 = vmatprep.subr.mxu0 0.0
        %307 = vmatpush1.msra.mxu0 0.0
        %308 = vmatprep.subr.mxu0 0.0
        %309 = vmatpush1.msra.mxu0 0.0
        %310 = vmatprep.subr.mxu0 0.0
        %311 = vmatpush1.msra.mxu0 0.0
        %312 = vmatprep.subr.mxu0 0.0
        %313 = vmatpush1.msra.mxu0 0.0
        %314 = vmatprep.subr.mxu0 0.0
        %315 = vmatpush1.msra.mxu0 0.0
        %316 = vmatprep.subr.mxu0 0.0
        %317 = vmatpush1.msra.mxu0 0.0
        %318 = vmatprep.subr.mxu0 0.0
        %319 = vmatpush1.msra.mxu0 0.0
        %320 = vmatprep.subr.mxu0 0.0
        %321 = vmatpush1.msra.mxu0 0.0
        %322 = vmatprep.mubr.f32.mxu0 0.0
        %323 = vmatmul.mubr.f32.gmra.mrb[0].mxu0 %v256
        %v324 = vpop.f32.mrb[0].mxu0
        %v325 = vadd.f32 %v252, %v324
        %v326 = vpop.f32.mrb[0].mxu0
        %327 = vdwg.mxu0
        %v328 = vld [vmem:[%s241] sm:$0x1]
        %v330 = vlaneseq
        %v331 = vshrl.u32 %v330, 7
        %v332 = vsub.s32 0, %v331
        %v333 = vrot.slane %v328, %v332
        %336 = vrot.lane.b32.xlu0 %v325, 96
        %v337 = vpop.permute.xlu0 %336
        %vm338 = vcmask 64512
        %v339 = vsel %vm338, %v325, 0
        %v341 = vsel %vm338, %v337, 0
        %343 = vmatprep.subr.mxu0 0.0
        %344 = vmatpush1.xpose.msra.mxu0 %v341
        %345 = vmatprep.subr.mxu0 0.0
        %346 = vmatpush1.xpose.msra.mxu0 0.0
        %347 = vmatprep.subr.mxu0 0.0
        %348 = vmatpush1.xpose.msra.mxu0 0.0
        %349 = vmatprep.subr.mxu0 0.0
        %350 = vmatpush1.xpose.msra.mxu0 0.0
        %351 = vmatprep.subr.mxu0 0.0
        %352 = vmatpush1.xpose.msra.mxu0 0.0
        %353 = vmatprep.subr.mxu0 0.0
        %354 = vmatpush1.xpose.msra.mxu0 0.0
        %355 = vmatprep.subr.mxu0 0.0
        %356 = vmatpush1.xpose.msra.mxu0 0.0
        %357 = vmatprep.subr.mxu0 0.0
        %358 = vmatpush1.xpose.msra.mxu0 0.0
        %359 = vmatprep.subr.mxu0 0.0
        %360 = vmatpush1.xpose.msra.mxu0 0.0
        %361 = vmatprep.subr.mxu0 0.0
        %362 = vmatpush1.xpose.msra.mxu0 0.0
        %363 = vmatprep.subr.mxu0 0.0
        %364 = vmatpush1.xpose.msra.mxu0 0.0
        %365 = vmatprep.subr.mxu0 0.0
        %366 = vmatpush1.xpose.msra.mxu0 0.0
        %367 = vmatprep.subr.mxu0 0.0
        %368 = vmatpush1.xpose.msra.mxu0 0.0
        %369 = vmatprep.subr.mxu0 0.0
        %370 = vmatpush1.xpose.msra.mxu0 0.0
        %371 = vmatprep.subr.mxu0 0.0
        %372 = vmatpush1.xpose.msra.mxu0 0.0
        %373 = vmatprep.subr.mxu0 0.0
        %374 = vmatpush1.xpose.msra.mxu0 0.0
        %375 = vmatprep.subr.mxu0 0.0
        %376 = vmatpush1.xpose.msra.mxu0 0.0
        %377 = vmatprep.subr.mxu0 0.0
        %378 = vmatpush1.xpose.msra.mxu0 0.0
        %379 = vmatprep.subr.mxu0 0.0
        %380 = vmatpush1.xpose.msra.mxu0 0.0
        %381 = vmatprep.subr.mxu0 0.0
        %382 = vmatpush1.xpose.msra.mxu0 0.0
        %383 = vmatprep.subr.mxu0 0.0
        %384 = vmatpush1.xpose.msra.mxu0 0.0
        %385 = vmatprep.subr.mxu0 0.0
        %386 = vmatpush1.xpose.msra.mxu0 0.0
        %387 = vmatprep.subr.mxu0 0.0
        %388 = vmatpush1.xpose.msra.mxu0 0.0
        %389 = vmatprep.subr.mxu0 0.0
        %390 = vmatpush1.xpose.msra.mxu0 0.0
        %391 = vmatprep.subr.mxu0 0.0
        %392 = vmatpush1.xpose.msra.mxu0 0.0
        %393 = vmatprep.subr.mxu0 0.0
        %394 = vmatpush1.xpose.msra.mxu0 0.0
        %395 = vmatprep.subr.mxu0 0.0
        %396 = vmatpush1.xpose.msra.mxu0 0.0
        %397 = vmatprep.subr.mxu0 0.0
        %398 = vmatpush1.xpose.msra.mxu0 0.0
        %399 = vmatprep.subr.mxu0 0.0
        %400 = vmatpush1.xpose.msra.mxu0 0.0
        %401 = vmatprep.subr.mxu0 0.0
        %402 = vmatpush1.xpose.msra.mxu0 0.0
        %403 = vmatprep.subr.mxu0 0.0
        %404 = vmatpush1.xpose.msra.mxu0 0.0
        %405 = vmatprep.subr.mxu0 0.0
        %406 = vmatpush1.xpose.msra.mxu0 0.0
        %407 = vmatprep.mubr.f32.mxu0 0.0
        %408 = vmatmul.mubr.f32.gmra.mrb[0].mxu0 %v339
        %v409 = vpop.f32.mrb[0].mxu0
        %v410 = vadd.f32 %v333, %v409
        %v411 = vpop.f32.mrb[0].mxu0
        %412 = vdwg.mxu0
        %v413 = vsel %vm338, %v410, -inf
        %414 = vmax.xlane.f32.xlu0 %v413
        %v415 = vpop.xlane.xlu0 %414
        %v416 = vsub.f32 %v410, %v415
        %v417 = vmul.f32 %v416, 1.442695
        %v418 = vpow.pop %v417
        %v419 = vsel %vm338, %v418, 0.0
        %420 = vadd.xlane.f32.xlu0 %v419
        %v421 = vpop.xlane.xlu0 %420
        %v422 = vrcp.pop %v421
        %v423 = vmul.f32 %v418, %v422
        %424 = vrot.lane.b32.xlu0 %v325, 64
        %v425 = vpop.permute.xlu0 %424
        %v428 = vsel %vm338, %v423, 0
        %430 = vmatprep.subr.mxu0 0.0
        %431 = vmatpush1.msra.mxu0 %v425
        %432 = vmatprep.subr.mxu0 0.0
        %433 = vmatpush1.msra.mxu0 0.0
        %434 = vmatprep.subr.mxu0 0.0
        %435 = vmatpush1.msra.mxu0 0.0
        %436 = vmatprep.subr.mxu0 0.0
        %437 = vmatpush1.msra.mxu0 0.0
        %438 = vmatprep.subr.mxu0 0.0
        %439 = vmatpush1.msra.mxu0 0.0
        %440 = vmatprep.subr.mxu0 0.0
        %441 = vmatpush1.msra.mxu0 0.0
        %442 = vmatprep.subr.mxu0 0.0
        %443 = vmatpush1.msra.mxu0 0.0
        %444 = vmatprep.subr.mxu0 0.0
        %445 = vmatpush1.msra.mxu0 0.0
        %446 = vmatprep.subr.mxu0 0.0
        %447 = vmatpush1.msra.mxu0 0.0
        %448 = vmatprep.subr.mxu0 0.0
        %449 = vmatpush1.msra.mxu0 0.0
        %450 = vmatprep.subr.mxu0 0.0
        %451 = vmatpush1.msra.mxu0 0.0
        %452 = vmatprep.subr.mxu0 0.0
        %453 = vmatpush1.msra.mxu0 0.0
        %454 = vmatprep.subr.mxu0 0.0
        %455 = vmatpush1.msra.mxu0 0.0
        %456 = vmatprep.subr.mxu0 0.0
        %457 = vmatpush1.msra.mxu0 0.0
        %458 = vmatprep.subr.mxu0 0.0
        %459 = vmatpush1.msra.mxu0 0.0
        %460 = vmatprep.subr.mxu0 0.0
        %461 = vmatpush1.msra.mxu0 0.0
        %462 = vmatprep.subr.mxu0 0.0
        %463 = vmatpush1.msra.mxu0 0.0
        %464 = vmatprep.subr.mxu0 0.0
        %465 = vmatpush1.msra.mxu0 0.0
        %466 = vmatprep.subr.mxu0 0.0
        %467 = vmatpush1.msra.mxu0 0.0
        %468 = vmatprep.subr.mxu0 0.0
        %469 = vmatpush1.msra.mxu0 0.0
        %470 = vmatprep.subr.mxu0 0.0
        %471 = vmatpush1.msra.mxu0 0.0
        %472 = vmatprep.subr.mxu0 0.0
        %473 = vmatpush1.msra.mxu0 0.0
        %474 = vmatprep.subr.mxu0 0.0
        %475 = vmatpush1.msra.mxu0 0.0
        %476 = vmatprep.subr.mxu0 0.0
        %477 = vmatpush1.msra.mxu0 0.0
        %478 = vmatprep.subr.mxu0 0.0
        %479 = vmatpush1.msra.mxu0 0.0
        %480 = vmatprep.subr.mxu0 0.0
        %481 = vmatpush1.msra.mxu0 0.0
        %482 = vmatprep.subr.mxu0 0.0
        %483 = vmatpush1.msra.mxu0 0.0
        %484 = vmatprep.subr.mxu0 0.0
        %485 = vmatpush1.msra.mxu0 0.0
        %486 = vmatprep.subr.mxu0 0.0
        %487 = vmatpush1.msra.mxu0 0.0
        %488 = vmatprep.subr.mxu0 0.0
        %489 = vmatpush1.msra.mxu0 0.0
        %490 = vmatprep.subr.mxu0 0.0
        %491 = vmatpush1.msra.mxu0 0.0
        %492 = vmatprep.subr.mxu0 0.0
        %493 = vmatpush1.msra.mxu0 0.0
        %494 = vmatprep.mubr.f32.mxu0 0.0
        %495 = vmatmul.mubr.f32.gmra.mrb[0].mxu0 %v428
        %v496 = vpop.f32.mrb[0].mxu0
        %v497 = vadd.f32 0.0, %v496
        %v498 = vpop.f32.mrb[0].mxu0
        %499 = vdwg.mxu0
        %500 = vrot.lane.b32.xlu0 %v325, 120
        %v501 = vpop.permute.xlu0 %500
        %502 = vrot.lane.b32.xlu0 %v325, 88
        %v503 = vpop.permute.xlu0 %502
        %v504 = vsel %vm338, %v501, 0
        %v506 = vsel %vm338, %v503, 0
        %508 = vmatprep.subr.mxu0 0.0
        %509 = vmatpush1.xpose.msra.mxu0 %v506
        %510 = vmatprep.subr.mxu0 0.0
        %511 = vmatpush1.xpose.msra.mxu0 0.0
        %512 = vmatprep.subr.mxu0 0.0
        %513 = vmatpush1.xpose.msra.mxu0 0.0
        %514 = vmatprep.subr.mxu0 0.0
        %515 = vmatpush1.xpose.msra.mxu0 0.0
        %516 = vmatprep.subr.mxu0 0.0
        %517 = vmatpush1.xpose.msra.mxu0 0.0
        %518 = vmatprep.subr.mxu0 0.0
        %519 = vmatpush1.xpose.msra.mxu0 0.0
        %520 = vmatprep.subr.mxu0 0.0
        %521 = vmatpush1.xpose.msra.mxu0 0.0
        %522 = vmatprep.subr.mxu0 0.0
        %523 = vmatpush1.xpose.msra.mxu0 0.0
        %524 = vmatprep.subr.mxu0 0.0
        %525 = vmatpush1.xpose.msra.mxu0 0.0
        %526 = vmatprep.subr.mxu0 0.0
        %527 = vmatpush1.xpose.msra.mxu0 0.0
        %528 = vmatprep.subr.mxu0 0.0
        %529 = vmatpush1.xpose.msra.mxu0 0.0
        %530 = vmatprep.subr.mxu0 0.0
        %531 = vmatpush1.xpose.msra.mxu0 0.0
        %532 = vmatprep.subr.mxu0 0.0
        %533 = vmatpush1.xpose.msra.mxu0 0.0
        %534 = vmatprep.subr.mxu0 0.0
        %535 = vmatpush1.xpose.msra.mxu0 0.0
        %536 = vmatprep.subr.mxu0 0.0
        %537 = vmatpush1.xpose.msra.mxu0 0.0
        %538 = vmatprep.subr.mxu0 0.0
        %539 = vmatpush1.xpose.msra.mxu0 0.0
        %540 = vmatprep.subr.mxu0 0.0
        %541 = vmatpush1.xpose.msra.mxu0 0.0
        %542 = vmatprep.subr.mxu0 0.0
        %543 = vmatpush1.xpose.msra.mxu0 0.0
        %544 = vmatprep.subr.mxu0 0.0
        %545 = vmatpush1.xpose.msra.mxu0 0.0
        %546 = vmatprep.subr.mxu0 0.0
        %547 = vmatpush1.xpose.msra.mxu0 0.0
        %548 = vmatprep.subr.mxu0 0.0
        %549 = vmatpush1.xpose.msra.mxu0 0.0
        %550 = vmatprep.subr.mxu0 0.0
        %551 = vmatpush1.xpose.msra.mxu0 0.0
        %552 = vmatprep.subr.mxu0 0.0
        %553 = vmatpush1.xpose.msra.mxu0 0.0
        %554 = vmatprep.subr.mxu0 0.0
        %555 = vmatpush1.xpose.msra.mxu0 0.0
        %556 = vmatprep.subr.mxu0 0.0
        %557 = vmatpush1.xpose.msra.mxu0 0.0
        %558 = vmatprep.subr.mxu0 0.0
        %559 = vmatpush1.xpose.msra.mxu0 0.0
        %560 = vmatprep.subr.mxu0 0.0
        %561 = vmatpush1.xpose.msra.mxu0 0.0
        %562 = vmatprep.subr.mxu0 0.0
        %563 = vmatpush1.xpose.msra.mxu0 0.0
        %564 = vmatprep.subr.mxu0 0.0
        %565 = vmatpush1.xpose.msra.mxu0 0.0
        %566 = vmatprep.subr.mxu0 0.0
        %567 = vmatpush1.xpose.msra.mxu0 0.0
        %568 = vmatprep.subr.mxu0 0.0
        %569 = vmatpush1.xpose.msra.mxu0 0.0
        %570 = vmatprep.subr.mxu0 0.0
        %571 = vmatpush1.xpose.msra.mxu0 0.0
        %572 = vmatprep.mubr.f32.mxu0 0.0
        %573 = vmatmul.mubr.f32.gmra.mrb[0].mxu0 %v504
        %v574 = vpop.f32.mrb[0].mxu0
        %v575 = vadd.f32 %v333, %v574
        %v576 = vpop.f32.mrb[0].mxu0
        %577 = vdwg.mxu0
        %v578 = vsel %vm338, %v575, -inf
        %579 = vmax.xlane.f32.xlu0 %v578
        %v580 = vpop.xlane.xlu0 %579
        %v581 = vsub.f32 %v575, %v580
        %v582 = vmul.f32 %v581, 1.442695
        %v583 = vpow.pop %v582
        %v584 = vsel %vm338, %v583, 0.0
        %585 = vadd.xlane.f32.xlu0 %v584
        %v586 = vpop.xlane.xlu0 %585
        %v587 = vrcp.pop %v586
        %v588 = vmul.f32 %v583, %v587
        %589 = vrot.lane.b32.xlu0 %v325, 56
        %v590 = vpop.permute.xlu0 %589
        %v593 = vsel %vm338, %v588, 0
        %595 = vmatprep.subr.mxu0 0.0
        %596 = vmatpush1.msra.mxu0 %v590
        %597 = vmatprep.subr.mxu0 0.0
        %598 = vmatpush1.msra.mxu0 0.0
        %599 = vmatprep.subr.mxu0 0.0
        %600 = vmatpush1.msra.mxu0 0.0
        %601 = vmatprep.subr.mxu0 0.0
        %602 = vmatpush1.msra.mxu0 0.0
        %603 = vmatprep.subr.mxu0 0.0
        %604 = vmatpush1.msra.mxu0 0.0
        %605 = vmatprep.subr.mxu0 0.0
        %606 = vmatpush1.msra.mxu0 0.0
        %607 = vmatprep.subr.mxu0 0.0
        %608 = vmatpush1.msra.mxu0 0.0
        %609 = vmatprep.subr.mxu0 0.0
        %610 = vmatpush1.msra.mxu0 0.0
        %611 = vmatprep.subr.mxu0 0.0
        %612 = vmatpush1.msra.mxu0 0.0
        %613 = vmatprep.subr.mxu0 0.0
        %614 = vmatpush1.msra.mxu0 0.0
        %615 = vmatprep.subr.mxu0 0.0
        %616 = vmatpush1.msra.mxu0 0.0
        %617 = vmatprep.subr.mxu0 0.0
        %618 = vmatpush1.msra.mxu0 0.0
        %619 = vmatprep.subr.mxu0 0.0
        %620 = vmatpush1.msra.mxu0 0.0
        %621 = vmatprep.subr.mxu0 0.0
        %622 = vmatpush1.msra.mxu0 0.0
        %623 = vmatprep.subr.mxu0 0.0
        %624 = vmatpush1.msra.mxu0 0.0
        %625 = vmatprep.subr.mxu0 0.0
        %626 = vmatpush1.msra.mxu0 0.0
        %627 = vmatprep.subr.mxu0 0.0
        %628 = vmatpush1.msra.mxu0 0.0
        %629 = vmatprep.subr.mxu0 0.0
        %630 = vmatpush1.msra.mxu0 0.0
        %631 = vmatprep.subr.mxu0 0.0
        %632 = vmatpush1.msra.mxu0 0.0
        %633 = vmatprep.subr.mxu0 0.0
        %634 = vmatpush1.msra.mxu0 0.0
        %635 = vmatprep.subr.mxu0 0.0
        %636 = vmatpush1.msra.mxu0 0.0
        %637 = vmatprep.subr.mxu0 0.0
        %638 = vmatpush1.msra.mxu0 0.0
        %639 = vmatprep.subr.mxu0 0.0
        %640 = vmatpush1.msra.mxu0 0.0
        %641 = vmatprep.subr.mxu0 0.0
        %642 = vmatpush1.msra.mxu0 0.0
        %643 = vmatprep.subr.mxu0 0.0
        %644 = vmatpush1.msra.mxu0 0.0
        %645 = vmatprep.subr.mxu0 0.0
        %646 = vmatpush1.msra.mxu0 0.0
        %647 = vmatprep.subr.mxu0 0.0
        %648 = vmatpush1.msra.mxu0 0.0
        %649 = vmatprep.subr.mxu0 0.0
        %650 = vmatpush1.msra.mxu0 0.0
        %651 = vmatprep.subr.mxu0 0.0
        %652 = vmatpush1.msra.mxu0 0.0
        %653 = vmatprep.subr.mxu0 0.0
        %654 = vmatpush1.msra.mxu0 0.0
        %655 = vmatprep.subr.mxu0 0.0
        %656 = vmatpush1.msra.mxu0 0.0
        %657 = vmatprep.subr.mxu0 0.0
        %658 = vmatpush1.msra.mxu0 0.0
        %659 = vmatprep.mubr.f32.mxu0 0.0
        %660 = vmatmul.mubr.f32.gmra.mrb[0].mxu0 %v593
        %v661 = vpop.f32.mrb[0].mxu0
        %v662 = vadd.f32 0.0, %v661
        %v663 = vpop.f32.mrb[0].mxu0
        %664 = vdwg.mxu0
        %665 = vrot.lane.b32.xlu0 %v325, 112
        %v666 = vpop.permute.xlu0 %665
        %667 = vrot.lane.b32.xlu0 %v325, 80
        %v668 = vpop.permute.xlu0 %667
        %v669 = vsel %vm338, %v666, 0
        %v671 = vsel %vm338, %v668, 0
        %673 = vmatprep.subr.mxu0 0.0
        %674 = vmatpush1.xpose.msra.mxu0 %v671
        %675 = vmatprep.subr.mxu0 0.0
        %676 = vmatpush1.xpose.msra.mxu0 0.0
        %677 = vmatprep.subr.mxu0 0.0
        %678 = vmatpush1.xpose.msra.mxu0 0.0
        %679 = vmatprep.subr.mxu0 0.0
        %680 = vmatpush1.xpose.msra.mxu0 0.0
        %681 = vmatprep.subr.mxu0 0.0
        %682 = vmatpush1.xpose.msra.mxu0 0.0
        %683 = vmatprep.subr.mxu0 0.0
        %684 = vmatpush1.xpose.msra.mxu0 0.0
        %685 = vmatprep.subr.mxu0 0.0
        %686 = vmatpush1.xpose.msra.mxu0 0.0
        %687 = vmatprep.subr.mxu0 0.0
        %688 = vmatpush1.xpose.msra.mxu0 0.0
        %689 = vmatprep.subr.mxu0 0.0
        %690 = vmatpush1.xpose.msra.mxu0 0.0
        %691 = vmatprep.subr.mxu0 0.0
        %692 = vmatpush1.xpose.msra.mxu0 0.0
        %693 = vmatprep.subr.mxu0 0.0
        %694 = vmatpush1.xpose.msra.mxu0 0.0
        %695 = vmatprep.subr.mxu0 0.0
        %696 = vmatpush1.xpose.msra.mxu0 0.0
        %697 = vmatprep.subr.mxu0 0.0
        %698 = vmatpush1.xpose.msra.mxu0 0.0
        %699 = vmatprep.subr.mxu0 0.0
        %700 = vmatpush1.xpose.msra.mxu0 0.0
        %701 = vmatprep.subr.mxu0 0.0
        %702 = vmatpush1.xpose.msra.mxu0 0.0
        %703 = vmatprep.subr.mxu0 0.0
        %704 = vmatpush1.xpose.msra.mxu0 0.0
        %705 = vmatprep.subr.mxu0 0.0
        %706 = vmatpush1.xpose.msra.mxu0 0.0
        %707 = vmatprep.subr.mxu0 0.0
        %708 = vmatpush1.xpose.msra.mxu0 0.0
        %709 = vmatprep.subr.mxu0 0.0
        %710 = vmatpush1.xpose.msra.mxu0 0.0
        %711 = vmatprep.subr.mxu0 0.0
        %712 = vmatpush1.xpose.msra.mxu0 0.0
        %713 = vmatprep.subr.mxu0 0.0
        %714 = vmatpush1.xpose.msra.mxu0 0.0
        %715 = vmatprep.subr.mxu0 0.0
        %716 = vmatpush1.xpose.msra.mxu0 0.0
        %717 = vmatprep.subr.mxu0 0.0
        %718 = vmatpush1.xpose.msra.mxu0 0.0
        %719 = vmatprep.subr.mxu0 0.0
        %720 = vmatpush1.xpose.msra.mxu0 0.0
        %721 = vmatprep.subr.mxu0 0.0
        %722 = vmatpush1.xpose.msra.mxu0 0.0
        %723 = vmatprep.subr.mxu0 0.0
        %724 = vmatpush1.xpose.msra.mxu0 0.0
        %725 = vmatprep.subr.mxu0 0.0
        %726 = vmatpush1.xpose.msra.mxu0 0.0
        %727 = vmatprep.subr.mxu0 0.0
        %728 = vmatpush1.xpose.msra.mxu0 0.0
        %729 = vmatprep.subr.mxu0 0.0
        %730 = vmatpush1.xpose.msra.mxu0 0.0
        %731 = vmatprep.subr.mxu0 0.0
        %732 = vmatpush1.xpose.msra.mxu0 0.0
        %733 = vmatprep.subr.mxu0 0.0
        %734 = vmatpush1.xpose.msra.mxu0 0.0
        %735 = vmatprep.subr.mxu0 0.0
        %736 = vmatpush1.xpose.msra.mxu0 0.0
        %737 = vmatprep.mubr.f32.mxu0 0.0
        %738 = vmatmul.mubr.f32.gmra.mrb[0].mxu0 %v669
        %v739 = vpop.f32.mrb[0].mxu0
        %v740 = vadd.f32 %v333, %v739
        %v741 = vpop.f32.mrb[0].mxu0
        %742 = vdwg.mxu0
        %v743 = vsel %vm338, %v740, -inf
        %744 = vmax.xlane.f32.xlu0 %v743
        %v745 = vpop.xlane.xlu0 %744
        %v746 = vsub.f32 %v740, %v745
        %v747 = vmul.f32 %v746, 1.442695
        %v748 = vpow.pop %v747
        %v749 = vsel %vm338, %v748, 0.0
        %750 = vadd.xlane.f32.xlu0 %v749
        %v751 = vpop.xlane.xlu0 %750
        %v752 = vrcp.pop %v751
        %v753 = vmul.f32 %v748, %v752
        %754 = vrot.lane.b32.xlu0 %v325, 48
        %v755 = vpop.permute.xlu0 %754
        %v758 = vsel %vm338, %v753, 0
        %760 = vmatprep.subr.mxu0 0.0
        %761 = vmatpush1.msra.mxu0 %v755
        %762 = vmatprep.subr.mxu0 0.0
        %763 = vmatpush1.msra.mxu0 0.0
        %764 = vmatprep.subr.mxu0 0.0
        %765 = vmatpush1.msra.mxu0 0.0
        %766 = vmatprep.subr.mxu0 0.0
        %767 = vmatpush1.msra.mxu0 0.0
        %768 = vmatprep.subr.mxu0 0.0
        %769 = vmatpush1.msra.mxu0 0.0
        %770 = vmatprep.subr.mxu0 0.0
        %771 = vmatpush1.msra.mxu0 0.0
        %772 = vmatprep.subr.mxu0 0.0
        %773 = vmatpush1.msra.mxu0 0.0
        %774 = vmatprep.subr.mxu0 0.0
        %775 = vmatpush1.msra.mxu0 0.0
        %776 = vmatprep.subr.mxu0 0.0
        %777 = vmatpush1.msra.mxu0 0.0
        %778 = vmatprep.subr.mxu0 0.0
        %779 = vmatpush1.msra.mxu0 0.0
        %780 = vmatprep.subr.mxu0 0.0
        %781 = vmatpush1.msra.mxu0 0.0
        %782 = vmatprep.subr.mxu0 0.0
        %783 = vmatpush1.msra.mxu0 0.0
        %784 = vmatprep.subr.mxu0 0.0
        %785 = vmatpush1.msra.mxu0 0.0
        %786 = vmatprep.subr.mxu0 0.0
        %787 = vmatpush1.msra.mxu0 0.0
        %788 = vmatprep.subr.mxu0 0.0
        %789 = vmatpush1.msra.mxu0 0.0
        %790 = vmatprep.subr.mxu0 0.0
        %791 = vmatpush1.msra.mxu0 0.0
        %792 = vmatprep.subr.mxu0 0.0
        %793 = vmatpush1.msra.mxu0 0.0
        %794 = vmatprep.subr.mxu0 0.0
        %795 = vmatpush1.msra.mxu0 0.0
        %796 = vmatprep.subr.mxu0 0.0
        %797 = vmatpush1.msra.mxu0 0.0
        %798 = vmatprep.subr.mxu0 0.0
        %799 = vmatpush1.msra.mxu0 0.0
        %800 = vmatprep.subr.mxu0 0.0
        %801 = vmatpush1.msra.mxu0 0.0
        %802 = vmatprep.subr.mxu0 0.0
        %803 = vmatpush1.msra.mxu0 0.0
        %804 = vmatprep.subr.mxu0 0.0
        %805 = vmatpush1.msra.mxu0 0.0
        %806 = vmatprep.subr.mxu0 0.0
        %807 = vmatpush1.msra.mxu0 0.0
        %808 = vmatprep.subr.mxu0 0.0
        %809 = vmatpush1.msra.mxu0 0.0
        %810 = vmatprep.subr.mxu0 0.0
        %811 = vmatpush1.msra.mxu0 0.0
        %812 = vmatprep.subr.mxu0 0.0
        %813 = vmatpush1.msra.mxu0 0.0
        %814 = vmatprep.subr.mxu0 0.0
        %815 = vmatpush1.msra.mxu0 0.0
        %816 = vmatprep.subr.mxu0 0.0
        %817 = vmatpush1.msra.mxu0 0.0
        %818 = vmatprep.subr.mxu0 0.0
        %819 = vmatpush1.msra.mxu0 0.0
        %820 = vmatprep.subr.mxu0 0.0
        %821 = vmatpush1.msra.mxu0 0.0
        %822 = vmatprep.subr.mxu0 0.0
        %823 = vmatpush1.msra.mxu0 0.0
        %824 = vmatprep.mubr.f32.mxu0 0.0
        %825 = vmatmul.mubr.f32.gmra.mrb[0].mxu0 %v758
        %v826 = vpop.f32.mrb[0].mxu0
        %v827 = vadd.f32 0.0, %v826
        %v828 = vpop.f32.mrb[0].mxu0
        %829 = vdwg.mxu0
        %830 = vrot.lane.b32.xlu0 %v325, 104
        %v831 = vpop.permute.xlu0 %830
        %832 = vrot.lane.b32.xlu0 %v325, 72
        %v833 = vpop.permute.xlu0 %832
        %v834 = vsel %vm338, %v831, 0
        %v836 = vsel %vm338, %v833, 0
        %838 = vmatprep.subr.mxu0 0.0
        %839 = vmatpush1.xpose.msra.mxu0 %v836
        %840 = vmatprep.subr.mxu0 0.0
        %841 = vmatpush1.xpose.msra.mxu0 0.0
        %842 = vmatprep.subr.mxu0 0.0
        %843 = vmatpush1.xpose.msra.mxu0 0.0
        %844 = vmatprep.subr.mxu0 0.0
        %845 = vmatpush1.xpose.msra.mxu0 0.0
        %846 = vmatprep.subr.mxu0 0.0
        %847 = vmatpush1.xpose.msra.mxu0 0.0
        %848 = vmatprep.subr.mxu0 0.0
        %849 = vmatpush1.xpose.msra.mxu0 0.0
        %850 = vmatprep.subr.mxu0 0.0
        %851 = vmatpush1.xpose.msra.mxu0 0.0
        %852 = vmatprep.subr.mxu0 0.0
        %853 = vmatpush1.xpose.msra.mxu0 0.0
        %854 = vmatprep.subr.mxu0 0.0
        %855 = vmatpush1.xpose.msra.mxu0 0.0
        %856 = vmatprep.subr.mxu0 0.0
        %857 = vmatpush1.xpose.msra.mxu0 0.0
        %858 = vmatprep.subr.mxu0 0.0
        %859 = vmatpush1.xpose.msra.mxu0 0.0
        %860 = vmatprep.subr.mxu0 0.0
        %861 = vmatpush1.xpose.msra.mxu0 0.0
        %862 = vmatprep.subr.mxu0 0.0
        %863 = vmatpush1.xpose.msra.mxu0 0.0
        %864 = vmatprep.subr.mxu0 0.0
        %865 = vmatpush1.xpose.msra.mxu0 0.0
        %866 = vmatprep.subr.mxu0 0.0
        %867 = vmatpush1.xpose.msra.mxu0 0.0
        %868 = vmatprep.subr.mxu0 0.0
        %869 = vmatpush1.xpose.msra.mxu0 0.0
        %870 = vmatprep.subr.mxu0 0.0
        %871 = vmatpush1.xpose.msra.mxu0 0.0
        %872 = vmatprep.subr.mxu0 0.0
        %873 = vmatpush1.xpose.msra.mxu0 0.0
        %874 = vmatprep.subr.mxu0 0.0
        %875 = vmatpush1.xpose.msra.mxu0 0.0
        %876 = vmatprep.subr.mxu0 0.0
        %877 = vmatpush1.xpose.msra.mxu0 0.0
        %878 = vmatprep.subr.mxu0 0.0
        %879 = vmatpush1.xpose.msra.mxu0 0.0
        %880 = vmatprep.subr.mxu0 0.0
        %881 = vmatpush1.xpose.msra.mxu0 0.0
        %882 = vmatprep.subr.mxu0 0.0
        %883 = vmatpush1.xpose.msra.mxu0 0.0
        %884 = vmatprep.subr.mxu0 0.0
        %885 = vmatpush1.xpose.msra.mxu0 0.0
        %886 = vmatprep.subr.mxu0 0.0
        %887 = vmatpush1.xpose.msra.mxu0 0.0
        %888 = vmatprep.subr.mxu0 0.0
        %889 = vmatpush1.xpose.msra.mxu0 0.0
        %890 = vmatprep.subr.mxu0 0.0
        %891 = vmatpush1.xpose.msra.mxu0 0.0
        %892 = vmatprep.subr.mxu0 0.0
        %893 = vmatpush1.xpose.msra.mxu0 0.0
        %894 = vmatprep.subr.mxu0 0.0
        %895 = vmatpush1.xpose.msra.mxu0 0.0
        %896 = vmatprep.subr.mxu0 0.0
        %897 = vmatpush1.xpose.msra.mxu0 0.0
        %898 = vmatprep.subr.mxu0 0.0
        %899 = vmatpush1.xpose.msra.mxu0 0.0
        %900 = vmatprep.subr.mxu0 0.0
        %901 = vmatpush1.xpose.msra.mxu0 0.0
        %902 = vmatprep.mubr.f32.mxu0 0.0
        %903 = vmatmul.mubr.f32.gmra.mrb[0].mxu0 %v834
        %v904 = vpop.f32.mrb[0].mxu0
        %v905 = vadd.f32 %v333, %v904
        %v906 = vpop.f32.mrb[0].mxu0
        %907 = vdwg.mxu0
        %v908 = vsel %vm338, %v905, -inf
        %909 = vmax.xlane.f32.xlu0 %v908
        %v910 = vpop.xlane.xlu0 %909
        %v911 = vsub.f32 %v905, %v910
        %v912 = vmul.f32 %v911, 1.442695
        %v913 = vpow.pop %v912
        %v914 = vsel %vm338, %v913, 0.0
        %915 = vadd.xlane.f32.xlu0 %v914
        %v916 = vpop.xlane.xlu0 %915
        %v917 = vrcp.pop %v916
        %v918 = vmul.f32 %v913, %v917
        %919 = vrot.lane.b32.xlu0 %v325, 40
        %v920 = vpop.permute.xlu0 %919
        %v923 = vsel %vm338, %v918, 0
        %925 = vmatprep.subr.mxu0 0.0
        %926 = vmatpush1.msra.mxu0 %v920
        %927 = vmatprep.subr.mxu0 0.0
        %928 = vmatpush1.msra.mxu0 0.0
        %929 = vmatprep.subr.mxu0 0.0
        %930 = vmatpush1.msra.mxu0 0.0
        %931 = vmatprep.subr.mxu0 0.0
        %932 = vmatpush1.msra.mxu0 0.0
        %933 = vmatprep.subr.mxu0 0.0
        %934 = vmatpush1.msra.mxu0 0.0
        %935 = vmatprep.subr.mxu0 0.0
        %936 = vmatpush1.msra.mxu0 0.0
        %937 = vmatprep.subr.mxu0 0.0
        %938 = vmatpush1.msra.mxu0 0.0
        %939 = vmatprep.subr.mxu0 0.0
        %940 = vmatpush1.msra.mxu0 0.0
        %941 = vmatprep.subr.mxu0 0.0
        %942 = vmatpush1.msra.mxu0 0.0
        %943 = vmatprep.subr.mxu0 0.0
        %944 = vmatpush1.msra.mxu0 0.0
        %945 = vmatprep.subr.mxu0 0.0
        %946 = vmatpush1.msra.mxu0 0.0
        %947 = vmatprep.subr.mxu0 0.0
        %948 = vmatpush1.msra.mxu0 0.0
        %949 = vmatprep.subr.mxu0 0.0
        %950 = vmatpush1.msra.mxu0 0.0
        %951 = vmatprep.subr.mxu0 0.0
        %952 = vmatpush1.msra.mxu0 0.0
        %953 = vmatprep.subr.mxu0 0.0
        %954 = vmatpush1.msra.mxu0 0.0
        %955 = vmatprep.subr.mxu0 0.0
        %956 = vmatpush1.msra.mxu0 0.0
        %957 = vmatprep.subr.mxu0 0.0
        %958 = vmatpush1.msra.mxu0 0.0
        %959 = vmatprep.subr.mxu0 0.0
        %960 = vmatpush1.msra.mxu0 0.0
        %961 = vmatprep.subr.mxu0 0.0
        %962 = vmatpush1.msra.mxu0 0.0
        %963 = vmatprep.subr.mxu0 0.0
        %964 = vmatpush1.msra.mxu0 0.0
        %965 = vmatprep.subr.mxu0 0.0
        %966 = vmatpush1.msra.mxu0 0.0
        %967 = vmatprep.subr.mxu0 0.0
        %968 = vmatpush1.msra.mxu0 0.0
        %969 = vmatprep.subr.mxu0 0.0
        %970 = vmatpush1.msra.mxu0 0.0
        %971 = vmatprep.subr.mxu0 0.0
        %972 = vmatpush1.msra.mxu0 0.0
        %973 = vmatprep.subr.mxu0 0.0
        %974 = vmatpush1.msra.mxu0 0.0
        %975 = vmatprep.subr.mxu0 0.0
        %976 = vmatpush1.msra.mxu0 0.0
        %977 = vmatprep.subr.mxu0 0.0
        %978 = vmatpush1.msra.mxu0 0.0
        %979 = vmatprep.subr.mxu0 0.0
        %980 = vmatpush1.msra.mxu0 0.0
        %981 = vmatprep.subr.mxu0 0.0
        %982 = vmatpush1.msra.mxu0 0.0
        %983 = vmatprep.subr.mxu0 0.0
        %984 = vmatpush1.msra.mxu0 0.0
        %985 = vmatprep.subr.mxu0 0.0
        %986 = vmatpush1.msra.mxu0 0.0
        %987 = vmatprep.subr.mxu0 0.0
        %988 = vmatpush1.msra.mxu0 0.0
        %989 = vmatprep.mubr.f32.mxu0 0.0
        %990 = vmatmul.mubr.f32.gmra.mrb[0].mxu0 %v923
        %v991 = vpop.f32.mrb[0].mxu0
        %v992 = vadd.f32 0.0, %v991
        %v993 = vpop.f32.mrb[0].mxu0
        %994 = vdwg.mxu0
        %996 = vrot.lane.b32.xlu0 %v662, 8
        %v997 = vpop.permute.xlu0 %996
        %1000 = vrot.lane.b32.xlu0 %v827, 16
        %v1001 = vpop.permute.xlu0 %1000
        %1004 = vrot.lane.b32.xlu0 %v992, 24
        %v1005 = vpop.permute.xlu0 %1004
        %v1007 = vsel %vm338, %v497, %v997
        %vm1008 = vcmask 130048
        %v1009 = vsel %vm1008, %v1007, %v1001
        %vm1010 = vcmask 195584
        %v1011 = vsel %vm1010, %v1009, %v1005
        %1012 = vst.msk [vmem:[%s238] sm:$0xff] %vm254, %v1011
        %s1013 = sand.u32 %s124, 1
        %s1014 = scalar_lea.sflag [#allocation4], %s1013
        %s1015 = sand.u32 %s124, 1
        %s1016 = smul.addr %s1015, 8
        %s1017 = scalar_lea.vmem [#allocation7], %s1016
        // Predicated region
        $region45: #{tpu_custom_call.1} parent=35 // pred_check
          %p1018 = pneg %p134
        $region46: #{tpu_custom_call.1} parent=35 // pred_check_branch
          %1020 = sbr.rel (%p1018) target = $region48
        $region47: #{tpu_custom_call.1} parent=35 // pred_region
          %s1022 = ssub.s32 128, 128
          %1023 = vsyncadd %s1014, %s1022
          %s1024 = smul.addr %s22, 128
          %s1025 = scalar_lea.hbm %s4, %s1024
          %s1027 = sshll.u32 %s1017, 4
          %s1028 = int_to_ptr.vmem [resolvable:$true] %s1027
          %1030 = dma.vmem_to_hbm [thread:$0]  %s1028, 128, %s1025, %s1014
        $region48: #{tpu_custom_call.1} parent=35 // pred_fallthru
          _
      $region36: #{tpu_custom_call.1} parent=5 // pred_fallthru
        _
      %p1031 = scmp.le.s32.totalorder 2, %s17
      // Predicated region
      $region49: #{tpu_custom_call.1} parent=5 // pred_check
        %p1032 = pneg %p1031
      $region50: #{tpu_custom_call.1} parent=5 // pred_check_branch
        %1034 = sbr.rel (%p1032) target = $region52
      $region51: #{tpu_custom_call.1} parent=5 // pred_region
        %s1035 = ssub.s32 %s17, 2
        // Predicated region
        $region53: #{tpu_custom_call.1} parent=51 // pred_check
          %p1036 = pneg %p140
        $region54: #{tpu_custom_call.1} parent=51 // pred_check_branch
          %1038 = sbr.rel (%p1036) target = $region56
        $region55: #{tpu_custom_call.1} parent=51 // pred_region
          %s1039 = sand.u32 %s125, 1
          %s1040 = scalar_lea.sflag [#allocation4], %s1039
          %s1041 = sand.u32 %s125, 1
          %s1042 = smul.addr %s1041, 8
          %s1043 = scalar_lea.vmem [#allocation7], %s1042
          %1044 = dma.done %s1040, 128
        $region56: #{tpu_custom_call.1} parent=51 // pred_fallthru
          _
      $region52: #{tpu_custom_call.1} parent=5 // pred_fallthru
        _
    $region6: #{tpu_custom_call.1} parent=1 // loop_footer
      %s21 = sadd.s32 1, %s17
    $region7: #{tpu_custom_call.1} parent=1 // loop_footer_branch
      %16 = sbr.rel target = $region3
    $region8: #{tpu_custom_call.1} parent=1 // loop_exit
      _
    %1045 = vsyncpa [#allocation3], 1
    %s1046 = scalar_lea.sflag [#allocation3], 1
    %1047 = vsyncpa %s1046, 1
    %1048 = vsyncpa [#allocation6], 1
    %1049 = vsyncpa [#allocation4], 1
    %s1050 = scalar_lea.sflag [#allocation4], 1
    %1051 = vsyncpa %s1050, 1

</llo_original>
